<compile_context>
chip_gen: v7x
topology: tpu7x:2x2x1
jax: 0.10.0
libtpu: 0.0.40
codegen_flags: <defaults>
</compile_context>

<pallas_src>
import numpy as np
import jax
import jax.numpy as jnp
from jax.experimental import pallas as pl
from jax.experimental.pallas import tpu as pltpu


# ----------------------------------------------------------------------------
# Pallas kernel: fused matvec + tanh + alpha blend + cumprod (single step).
# ----------------------------------------------------------------------------
def schedule_param_alpha_kernel(
    h1_ref,      # (1, H)      f32    precomputed seed @ W1^T + b1 (padded)
    weff_ref,    # (H, CP)     f32    folded W2^T @ W3^T (padded)
    beff_ref,    # (1, CP)     f32    folded b2 @ W3^T + b3 (padded)
    abase_ref,   # (1, CP)     f32    alpha_base (padded with 0.5)
    lp_ref,      # (1, CP)     f32    _lp        (padded with 0.0)
    tri_ref,     # (CP, CP)    f32    upper-triangular ones (cumsum as matmul)
    alpha_ref,   # out (1, CP) f32
    aacum_ref,   # out (1, CP) f32
):
    # h3 = h1 @ W_eff + b_eff            (1, CP), single MXU matvec
    h3 = jnp.dot(h1_ref[...], weff_ref[...],
                 preferred_element_type=jnp.float32) + beff_ref[...]
    out = jnp.tanh(h3)
    alpha = abase_ref[...] + out * lp_ref[...]
    alpha_ref[...] = alpha

    # cumprod(alpha) == exp(cumsum(log(alpha))); alpha > 0 by construction,
    # clamp anyway so a saturated tanh can't drive log() to -inf/NaN.
    # Padded lanes (alpha == 0.5) only feed cumsum entries j >= c_out, which
    # are sliced off in the wrapper.
    log_a = jnp.log(jnp.maximum(alpha, 1e-20))
    cum = jnp.dot(log_a, tri_ref[...], preferred_element_type=jnp.float32)
    aacum_ref[...] = jnp.exp(cum)


def schedule_param_alpha_forward(h1, w_eff, b_eff, alpha_base, lp, tri,
                                 *, c_out=16):
    """Single pallas_call, single grid step; all operands fit VMEM easily."""
    H = w_eff.shape[0]          # padded hidden (2048)
    CP = w_eff.shape[1]         # padded channels (128)

    grid_spec = pltpu.PrefetchScalarGridSpec(
        num_scalar_prefetch=0,
        grid=(1,),
        in_specs=[
            pl.BlockSpec((1, H),   lambda k: (0, 0)),   # h1
            pl.BlockSpec((H, CP),  lambda k: (0, 0)),   # W_eff
            pl.BlockSpec((1, CP),  lambda k: (0, 0)),   # b_eff
            pl.BlockSpec((1, CP),  lambda k: (0, 0)),   # alpha_base
            pl.BlockSpec((1, CP),  lambda k: (0, 0)),   # lp
            pl.BlockSpec((CP, CP), lambda k: (0, 0)),   # tri
        ],
        out_specs=[
            pl.BlockSpec((1, CP), lambda k: (0, 0)),
            pl.BlockSpec((1, CP), lambda k: (0, 0)),
        ],
    )

    cost = pl.CostEstimate(
        flops=2 * H * CP + 2 * CP * CP,
        transcendentals=3 * CP,
        bytes_accessed=(H * CP * 4          # W_eff
                        + H * 4             # h1
                        + CP * CP * 4       # tri
                        + 6 * CP * 4),      # b_eff, abase, lp, 2 outputs, slack
    )

    alpha_p, aacum_p = pl.pallas_call(
        schedule_param_alpha_kernel,
        out_shape=(
            jax.ShapeDtypeStruct((1, CP), jnp.float32),
            jax.ShapeDtypeStruct((1, CP), jnp.float32),
        ),
        grid_spec=grid_spec,
        compiler_params=pltpu.CompilerParams(
            dimension_semantics=("arbitrary",),
            vmem_limit_bytes=32 * 1024 * 1024),
        cost_estimate=cost,
    )(h1, w_eff, b_eff, alpha_base, lp, tri)

    # Slice the 128-lane padded outputs back to the real channel count.
    return alpha_p[:, :c_out], aacum_p[:, :c_out]


# ----------------------------------------------------------------------------
# Parameter construction (deterministic, mirrors __init__ shapes).
# ----------------------------------------------------------------------------
def build_params(key, num_timesteps=16, learning_portion=0.01,
                 hidden_pad=2048, chan_pad=128):
    in_dim, hid = 1000, 2000
    c = num_timesteps

    # Synthetic alpha_bar schedule (linear-beta DDPM style), then the
    # "alpha_bar is not None" branch of __init__.
    betas = np.linspace(1e-4, 2e-2, c, dtype=np.float64)
    alphas = 1.0 - betas
    alpha_bar = np.cumprod(alphas)
    a_base = np.concatenate([alpha_bar[:1], alpha_bar[1:] / alpha_bar[:-1]])
    assert a_base.min() > 0.0 and a_base.max() < 1.0
    lp = np.minimum(np.full_like(a_base, learning_portion), 1.0 - a_base)
    lp = np.minimum(a_base, lp)

    k1, k2, k3, k4, k5, k6 = jax.random.split(key, 6)
    scale = 0.01
    # torch.nn.Linear(in, out).weight has shape (out, in); we store W^T.
    w1t = jax.random.normal(k1, (in_dim, hid), jnp.float32) * scale
    b1 = jax.random.normal(k2, (1, hid), jnp.float32) * scale
    w2t = jax.random.normal(k3, (hid, hid), jnp.float32) * scale
    b2 = jax.random.normal(k4, (1, hid), jnp.float32) * scale
    w3t = jax.random.normal(k5, (hid, c), jnp.float32) * scale
    b3 = jax.random.normal(k6, (1, c), jnp.float32) * scale

    seed_k = jnp.full((1, in_dim), 0.5, dtype=jnp.float32)
    alpha_base = jnp.asarray(a_base, jnp.float32).reshape(1, c)
    lp_j = jnp.asarray(lp, jnp.float32).reshape(1, c)

    ref_params = (seed_k, w1t, b1, w2t, b2, w3t, b3, alpha_base, lp_j)

    # ---- Kernel-side packing -------------------------------------------------
    # seed is a fixed buffer -> fold layer 1 at build time (f32).
    h1 = seed_k @ w1t + b1                                          # (1, 2000)
    # No nonlinearity between layers 2 and 3 -> fold them too (f32):
    w_eff = w2t @ w3t                                               # (2000, 16)
    b_eff = b2 @ w3t + b3                                           # (1, 16)

    h1_p = jnp.zeros((1, hidden_pad), jnp.float32).at[:, :hid].set(h1)
    weff_p = jnp.zeros((hidden_pad, chan_pad), jnp.float32
                       ).at[:hid, :c].set(w_eff)
    beff_p = jnp.zeros((1, chan_pad), jnp.float32).at[:, :c].set(b_eff)
    # Pad alpha_base with 0.5 (keeps log() finite in padded lanes), lp with 0.
    ab_p = jnp.full((1, chan_pad), 0.5, jnp.float32).at[:, :c].set(alpha_base)
    lp_p = jnp.zeros((1, chan_pad), jnp.float32).at[:, :c].set(lp_j)
    tri = jnp.asarray(np.triu(np.ones((chan_pad, chan_pad), np.float32)))

    kernel_params = (h1_p, weff_p, beff_p, ab_p, lp_p, tri)
    return kernel_params, ref_params, c


def reference_forward(seed, w1t, b1, w2t, b2, w3t, b3, alpha_base, lp):
    h = seed @ w1t + b1
    h = h @ w2t + b2
    h = h @ w3t + b3
    out = jnp.tanh(h)
    alpha = alpha_base + out * lp
    aacum = jnp.cumprod(alpha, axis=1)
    return alpha, aacum


if __name__ == "__main__":
    kernel_params, ref_params, c = build_params(
        jax.random.PRNGKey(0), num_timesteps=16, learning_portion=0.01)

    alpha, aacum = schedule_param_alpha_forward(*kernel_params, c_out=c)
    jax.block_until_ready((alpha, aacum))

    alpha_ref, aacum_ref = reference_forward(*ref_params)
    assert alpha.shape == (1, c) and aacum.shape == (1, c)
    assert np.allclose(np.asarray(alpha), np.asarray(alpha_ref),
                       rtol=5e-3, atol=1e-4)
    assert np.allclose(np.asarray(aacum), np.asarray(aacum_ref),
                       rtol=5e-3, atol=1e-4)
    print("KERNEL_OK")
</pallas_src>

<mosaic_0001>
module attributes {stable_mosaic.version = 11 : i64} {
  func.func @schedule_param_alpha_kernel(%arg0: i32, %arg1: memref<1x2048xf32, #tpu.memory_space<vmem>>, %arg2: memref<2048x128xf32, #tpu.memory_space<vmem>>, %arg3: memref<1x128xf32, #tpu.memory_space<vmem>>, %arg4: memref<1x128xf32, #tpu.memory_space<vmem>>, %arg5: memref<1x128xf32, #tpu.memory_space<vmem>>, %arg6: memref<128x128xf32, #tpu.memory_space<vmem>>, %arg7: memref<1x128xf32, #tpu.memory_space<vmem>>, %arg8: memref<1x128xf32, #tpu.memory_space<vmem>>) attributes {dimension_semantics = [#tpu.dimension_semantics<arbitrary>], iteration_bounds = array<i64: 1>, scalar_prefetch = 0 : i64, scratch_operands = 0 : i64, tpu.core_type = #tpu.core_type<tc>, window_params = [{pipeline_mode = #tpu.pipeline_mode<synchronous>, transform_indices = @transform_0, window_bounds = array<i64: 1, 2048>}, {pipeline_mode = #tpu.pipeline_mode<synchronous>, transform_indices = @transform_1, window_bounds = array<i64: 2048, 128>}, {pipeline_mode = #tpu.pipeline_mode<synchronous>, transform_indices = @transform_2, window_bounds = array<i64: 1, 128>}, {pipeline_mode = #tpu.pipeline_mode<synchronous>, transform_indices = @transform_3, window_bounds = array<i64: 1, 128>}, {pipeline_mode = #tpu.pipeline_mode<synchronous>, transform_indices = @transform_4, window_bounds = array<i64: 1, 128>}, {pipeline_mode = #tpu.pipeline_mode<synchronous>, transform_indices = @transform_5, window_bounds = array<i64: 128, 128>}, {pipeline_mode = #tpu.pipeline_mode<synchronous>, transform_indices = @transform_6, window_bounds = array<i64: 1, 128>}, {pipeline_mode = #tpu.pipeline_mode<synchronous>, transform_indices = @transform_7, window_bounds = array<i64: 1, 128>}]} {
    %c0 = arith.constant 0 : index
    %c0_0 = arith.constant 0 : index
    %0 = vector.load %arg1[%c0, %c0_0] : memref<1x2048xf32, #tpu.memory_space<vmem>>, vector<1x2048xf32>
    %c0_1 = arith.constant 0 : index
    %c0_2 = arith.constant 0 : index
    %1 = vector.load %arg2[%c0_1, %c0_2] : memref<2048x128xf32, #tpu.memory_space<vmem>>, vector<2048x128xf32>
    %cst = arith.constant dense<0.000000e+00> : vector<1x128xf32>
    %2 = tpu.matmul %0, %1, %cst {dimension_numbers = #tpu.dot_dimension_numbers<[1], [0], [0], [1], [0, 0, 1, 1], [], []>} : vector<1x2048xf32>, vector<2048x128xf32>, vector<1x128xf32> -> vector<1x128xf32>
    %c0_3 = arith.constant 0 : index
    %c0_4 = arith.constant 0 : index
    %3 = vector.load %arg3[%c0_3, %c0_4] : memref<1x128xf32, #tpu.memory_space<vmem>>, vector<1x128xf32>
    %4 = arith.addf %2, %3 : vector<1x128xf32>
    %5 = math.tanh %4 : vector<1x128xf32>
    %c0_5 = arith.constant 0 : index
    %c0_6 = arith.constant 0 : index
    %6 = vector.load %arg4[%c0_5, %c0_6] : memref<1x128xf32, #tpu.memory_space<vmem>>, vector<1x128xf32>
    %c0_7 = arith.constant 0 : index
    %c0_8 = arith.constant 0 : index
    %7 = vector.load %arg5[%c0_7, %c0_8] : memref<1x128xf32, #tpu.memory_space<vmem>>, vector<1x128xf32>
    %8 = arith.mulf %5, %7 : vector<1x128xf32>
    %9 = arith.addf %6, %8 : vector<1x128xf32>
    %c0_9 = arith.constant 0 : index
    %c0_10 = arith.constant 0 : index
    %10 = vector.load %arg7[%c0_9, %c0_10] : memref<1x128xf32, #tpu.memory_space<vmem>>, vector<1x128xf32>
    tpu.vector_store %arg7[%c0_9, %c0_10], %9 {strides = array<i32>} : memref<1x128xf32, #tpu.memory_space<vmem>>, vector<1x128xf32>,
    %cst_11 = arith.constant 9.99999968E-21 : f32
    %11 = vector.broadcast %cst_11 : f32 to vector<1x128xf32>
    %12 = arith.maximumf %9, %11 : vector<1x128xf32>
    %13 = math.log %12 : vector<1x128xf32>
    %c0_12 = arith.constant 0 : index
    %c0_13 = arith.constant 0 : index
    %14 = vector.load %arg6[%c0_12, %c0_13] : memref<128x128xf32, #tpu.memory_space<vmem>>, vector<128x128xf32>
    %cst_14 = arith.constant dense<0.000000e+00> : vector<1x128xf32>
    %15 = tpu.matmul %13, %14, %cst_14 {dimension_numbers = #tpu.dot_dimension_numbers<[1], [0], [0], [1], [0, 0, 1, 1], [], []>} : vector<1x128xf32>, vector<128x128xf32>, vector<1x128xf32> -> vector<1x128xf32>
    %16 = math.exp %15 : vector<1x128xf32>
    %c0_15 = arith.constant 0 : index
    %c0_16 = arith.constant 0 : index
    %17 = vector.load %arg8[%c0_15, %c0_16] : memref<1x128xf32, #tpu.memory_space<vmem>>, vector<1x128xf32>
    tpu.vector_store %arg8[%c0_15, %c0_16], %16 {strides = array<i32>} : memref<1x128xf32, #tpu.memory_space<vmem>>, vector<1x128xf32>,
    return
  }
  func.func @transform_0(%arg0: i32) -> (i32, i32) {
    %c0_i32 = arith.constant 0 : i32
    %c0_i32_0 = arith.constant 0 : i32
    %c0_i32_1 = arith.constant 0 : i32
    return %c0_i32, %c0_i32_0 : i32, i32
  }
  func.func @transform_1(%arg0: i32) -> (i32, i32) {
    %c0_i32 = arith.constant 0 : i32
    %c0_i32_0 = arith.constant 0 : i32
    %c0_i32_1 = arith.constant 0 : i32
    return %c0_i32, %c0_i32_0 : i32, i32
  }
  func.func @transform_2(%arg0: i32) -> (i32, i32) {
    %c0_i32 = arith.constant 0 : i32
    %c0_i32_0 = arith.constant 0 : i32
    %c0_i32_1 = arith.constant 0 : i32
    return %c0_i32, %c0_i32_0 : i32, i32
  }
  func.func @transform_3(%arg0: i32) -> (i32, i32) {
    %c0_i32 = arith.constant 0 : i32
    %c0_i32_0 = arith.constant 0 : i32
    %c0_i32_1 = arith.constant 0 : i32
    return %c0_i32, %c0_i32_0 : i32, i32
  }
  func.func @transform_4(%arg0: i32) -> (i32, i32) {
    %c0_i32 = arith.constant 0 : i32
    %c0_i32_0 = arith.constant 0 : i32
    %c0_i32_1 = arith.constant 0 : i32
    return %c0_i32, %c0_i32_0 : i32, i32
  }
  func.func @transform_5(%arg0: i32) -> (i32, i32) {
    %c0_i32 = arith.constant 0 : i32
    %c0_i32_0 = arith.constant 0 : i32
    %c0_i32_1 = arith.constant 0 : i32
    return %c0_i32, %c0_i32_0 : i32, i32
  }
  func.func @transform_6(%arg0: i32) -> (i32, i32) {
    %c0_i32 = arith.constant 0 : i32
    %c0_i32_0 = arith.constant 0 : i32
    %c0_i32_1 = arith.constant 0 : i32
    return %c0_i32, %c0_i32_0 : i32, i32
  }
  func.func @transform_7(%arg0: i32) -> (i32, i32) {
    %c0_i32 = arith.constant 0 : i32
    %c0_i32_0 = arith.constant 0 : i32
    %c0_i32_1 = arith.constant 0 : i32
    return %c0_i32, %c0_i32_0 : i32, i32
  }
}

</mosaic_0001>

<llo_original>
// kernel: tpu_custom_call.1
$region0: #{tpu_custom_call.1}
  #allocation0 [shape = 'u32[]', space=smem, size = 0x4, offset = 0x4, fixed_abs, tag = 'smem constant byte address 0x4 - core index']
  #allocation1 [shape = 'u32[144,128]{1,0:T(1,128)}', space=vmem, size = 0x12000, scoped, tag = 'internal scratch']
  %s0 = inlined_call_operand.hbm [shape: f32[1,2048], index: 0, kind: input, shape index: {}]
  %s1 = inlined_call_operand.hbm [shape: f32[2048,128], index: 1, kind: input, shape index: {}]
  %s2 = inlined_call_operand.vmem [shape: f32[1,128], index: 2, kind: input, shape index: {}]
  %s3 = inlined_call_operand.vmem [shape: f32[1,128], index: 3, kind: input, shape index: {}]
  %s4 = inlined_call_operand.vmem [shape: f32[1,128], index: 4, kind: input, shape index: {}]
  %s5 = inlined_call_operand.hbm [shape: f32[128,128], index: 5, kind: input, shape index: {}]
  %s6 = inlined_call_operand.hbm [shape: f32[1,128], index: 6, kind: output, shape index: {0}]
  %s7 = inlined_call_operand.hbm [shape: f32[1,128], index: 7, kind: output, shape index: {1}]
  %8 = xla_tuple %s6, %s7
  %s9 = sld [smem:[#allocation0]]
  $region54: #{tpu_custom_call.1} parent=0
    _
  %s11 = ssub.s32 1, %s9
  %s12 = scalar_select 0, %s11, %s9
  $region1: #{tpu_custom_call.1} parent=0
    #allocation2 [shape = 'u8[8192]{0}', space=vmem, size = 0x2000, scoped, tag = 'input window, operand 0, single buffered']
    #allocation3 [shape = 's32[1]{0}', space=sflag, size = 0x4, scoped, tag = 'scoped memory for tpu_custom_call.1']
    #allocation4 [shape = 's32[1]{0}', space=sflag, size = 0x4, scoped, tag = 'scoped memory for tpu_custom_call.1']
    #allocation5 [shape = 'u8[1048576]{0}', space=vmem, size = 0x100000, scoped, tag = 'input window, operand 1, single buffered']
    #allocation6 [shape = 's32[1]{0}', space=sflag, size = 0x4, scoped, tag = 'scoped memory for tpu_custom_call.1']
    #allocation7 [shape = 'u8[65536]{0}', space=vmem, size = 0x10000, scoped, tag = 'input window, operand 5, single buffered']
    #allocation8 [shape = 'u8[512]{0}', space=vmem, size = 0x400, scoped, tag = 'output window, operand 0, single buffered']
    #allocation9 [shape = 'u8[512]{0}', space=vmem, size = 0x400, scoped, tag = 'output window, operand 1, single buffered']
    #allocation10 [shape = 's32[1]{0}', space=sflag, size = 0x4, scoped, tag = 'scoped memory for tpu_custom_call.1']
    %13 = vsyncpa [#allocation3], 0
    %14 = vsyncpa [#allocation6], 0
    %15 = vsyncpa [#allocation4], 0
    %16 = vsyncpa [#allocation10], 0
    // Predicated region
    $region2: #{tpu_custom_call.1} parent=1 // pred_check
      _
    $region3: #{tpu_custom_call.1} parent=1 // pred_check_branch
      %18 = sbr.rel (0) target = $region5
    $region4: #{tpu_custom_call.1} parent=1 // pred_region
      %s20 = ssub.s32 256, 256
      %21 = vsyncadd [#allocation3], %s20
      %s23 = sshll.u32 [#allocation2], 4
      %s24 = int_to_ptr.vmem [resolvable:$true] %s23
      %26 = dma.hbm_to_vmem [thread:$0]  %s0, 256, %s24, [#allocation3]
    $region5: #{tpu_custom_call.1} parent=1 // pred_fallthru
      _
    // Predicated region
    $region6: #{tpu_custom_call.1} parent=1 // pred_check
      _
    $region7: #{tpu_custom_call.1} parent=1 // pred_check_branch
      %28 = sbr.rel (0) target = $region9
    $region8: #{tpu_custom_call.1} parent=1 // pred_region
      %s30 = ssub.s32 32768, 32768
      %31 = vsyncadd [#allocation6], %s30
      %s32 = sshll.u32 [#allocation5], 4
      %s33 = int_to_ptr.vmem [resolvable:$true] %s32
      %38 = dma.hbm_to_vmem [thread:$0]  %s1, 32768, %s33, [#allocation6], 128, 128, 8
    $region9: #{tpu_custom_call.1} parent=1 // pred_fallthru
      _
    // Predicated region
    $region10: #{tpu_custom_call.1} parent=1 // pred_check
      _
    $region11: #{tpu_custom_call.1} parent=1 // pred_check_branch
      %40 = sbr.rel (0) target = $region13
    $region12: #{tpu_custom_call.1} parent=1 // pred_region
      _
    $region13: #{tpu_custom_call.1} parent=1 // pred_fallthru
      _
    // Predicated region
    $region14: #{tpu_custom_call.1} parent=1 // pred_check
      _
    $region15: #{tpu_custom_call.1} parent=1 // pred_check_branch
      %42 = sbr.rel (0) target = $region17
    $region16: #{tpu_custom_call.1} parent=1 // pred_region
      _
    $region17: #{tpu_custom_call.1} parent=1 // pred_fallthru
      _
    // Predicated region
    $region18: #{tpu_custom_call.1} parent=1 // pred_check
      _
    $region19: #{tpu_custom_call.1} parent=1 // pred_check_branch
      %44 = sbr.rel (0) target = $region21
    $region20: #{tpu_custom_call.1} parent=1 // pred_region
      _
    $region21: #{tpu_custom_call.1} parent=1 // pred_fallthru
      _
    // Predicated region
    $region22: #{tpu_custom_call.1} parent=1 // pred_check
      _
    $region23: #{tpu_custom_call.1} parent=1 // pred_check_branch
      %46 = sbr.rel (0) target = $region25
    $region24: #{tpu_custom_call.1} parent=1 // pred_region
      %s48 = ssub.s32 2048, 2048
      %49 = vsyncadd [#allocation6], %s48
      %s50 = sshll.u32 [#allocation7], 4
      %s51 = int_to_ptr.vmem [resolvable:$true] %s50
      %56 = dma.hbm_to_vmem [thread:$0]  %s5, 2048, %s51, [#allocation6], 128, 128, 8
    $region25: #{tpu_custom_call.1} parent=1 // pred_fallthru
      _
    // Predicated region
    $region26: #{tpu_custom_call.1} parent=1 // pred_check
      _
    $region27: #{tpu_custom_call.1} parent=1 // pred_check_branch
      %58 = sbr.rel (0) target = $region29
    $region28: #{tpu_custom_call.1} parent=1 // pred_region
      %59 = dma.done [#allocation3], 256
    $region29: #{tpu_custom_call.1} parent=1 // pred_fallthru
      _
    // Predicated region
    $region30: #{tpu_custom_call.1} parent=1 // pred_check
      _
    $region31: #{tpu_custom_call.1} parent=1 // pred_check_branch
      %61 = sbr.rel (0) target = $region33
    $region32: #{tpu_custom_call.1} parent=1 // pred_region
      %62 = dma.done [#allocation6], 32768
    $region33: #{tpu_custom_call.1} parent=1 // pred_fallthru
      _
    // Predicated region
    $region34: #{tpu_custom_call.1} parent=1 // pred_check
      _
    $region35: #{tpu_custom_call.1} parent=1 // pred_check_branch
      %64 = sbr.rel (0) target = $region37
    $region36: #{tpu_custom_call.1} parent=1 // pred_region
      %65 = dma.done [#allocation6], 2048
    $region37: #{tpu_custom_call.1} parent=1 // pred_fallthru
      _
    %v66 = vld [vmem:[#allocation2] sm:$0xff]
    %v67 = vld [vmem:[#allocation2 + $0x8] sm:$0xff]
    %v68 = vld [vmem:[#allocation5] sm:$0xff]
    %v69 = vld [vmem:[#allocation5 + $0x8] sm:$0xff]
    %v70 = vld [vmem:[#allocation5 + $0x10] sm:$0xff]
    %v71 = vld [vmem:[#allocation5 + $0x18] sm:$0xff]
    %v72 = vld [vmem:[#allocation5 + $0x20] sm:$0xff]
    %v73 = vld [vmem:[#allocation5 + $0x28] sm:$0xff]
    %v74 = vld [vmem:[#allocation5 + $0x30] sm:$0xff]
    %v75 = vld [vmem:[#allocation5 + $0x38] sm:$0xff]
    %v76 = vld [vmem:[#allocation5 + $0x40] sm:$0xff]
    %v77 = vld [vmem:[#allocation5 + $0x48] sm:$0xff]
    %v78 = vld [vmem:[#allocation5 + $0x50] sm:$0xff]
    %v79 = vld [vmem:[#allocation5 + $0x58] sm:$0xff]
    %v80 = vld [vmem:[#allocation5 + $0x60] sm:$0xff]
    %v81 = vld [vmem:[#allocation5 + $0x68] sm:$0xff]
    %v82 = vld [vmem:[#allocation5 + $0x70] sm:$0xff]
    %v83 = vld [vmem:[#allocation5 + $0x78] sm:$0xff]
    %v84 = vld [vmem:[#allocation5 + $0x80] sm:$0xff]
    %v85 = vld [vmem:[#allocation5 + $0x88] sm:$0xff]
    %v86 = vld [vmem:[#allocation5 + $0x90] sm:$0xff]
    %v87 = vld [vmem:[#allocation5 + $0x98] sm:$0xff]
    %v88 = vld [vmem:[#allocation5 + $0xa0] sm:$0xff]
    %v89 = vld [vmem:[#allocation5 + $0xa8] sm:$0xff]
    %v90 = vld [vmem:[#allocation5 + $0xb0] sm:$0xff]
    %v91 = vld [vmem:[#allocation5 + $0xb8] sm:$0xff]
    %v92 = vld [vmem:[#allocation5 + $0xc0] sm:$0xff]
    %v93 = vld [vmem:[#allocation5 + $0xc8] sm:$0xff]
    %v94 = vld [vmem:[#allocation5 + $0xd0] sm:$0xff]
    %v95 = vld [vmem:[#allocation5 + $0xd8] sm:$0xff]
    %v96 = vld [vmem:[#allocation5 + $0xe0] sm:$0xff]
    %v97 = vld [vmem:[#allocation5 + $0xe8] sm:$0xff]
    %v98 = vld [vmem:[#allocation5 + $0xf0] sm:$0xff]
    %v99 = vld [vmem:[#allocation5 + $0xf8] sm:$0xff]
    %v100 = vld [vmem:[#allocation5 + $0x100] sm:$0xff]
    %v101 = vld [vmem:[#allocation5 + $0x108] sm:$0xff]
    %v102 = vld [vmem:[#allocation5 + $0x110] sm:$0xff]
    %v103 = vld [vmem:[#allocation5 + $0x118] sm:$0xff]
    %v104 = vld [vmem:[#allocation5 + $0x120] sm:$0xff]
    %v105 = vld [vmem:[#allocation5 + $0x128] sm:$0xff]
    %v106 = vld [vmem:[#allocation5 + $0x130] sm:$0xff]
    %v107 = vld [vmem:[#allocation5 + $0x138] sm:$0xff]
    %v108 = vld [vmem:[#allocation5 + $0x140] sm:$0xff]
    %v109 = vld [vmem:[#allocation5 + $0x148] sm:$0xff]
    %v110 = vld [vmem:[#allocation5 + $0x150] sm:$0xff]
    %v111 = vld [vmem:[#allocation5 + $0x158] sm:$0xff]
    %v112 = vld [vmem:[#allocation5 + $0x160] sm:$0xff]
    %v113 = vld [vmem:[#allocation5 + $0x168] sm:$0xff]
    %v114 = vld [vmem:[#allocation5 + $0x170] sm:$0xff]
    %v115 = vld [vmem:[#allocation5 + $0x178] sm:$0xff]
    %v116 = vld [vmem:[#allocation5 + $0x180] sm:$0xff]
    %v117 = vld [vmem:[#allocation5 + $0x188] sm:$0xff]
    %v118 = vld [vmem:[#allocation5 + $0x190] sm:$0xff]
    %v119 = vld [vmem:[#allocation5 + $0x198] sm:$0xff]
    %v120 = vld [vmem:[#allocation5 + $0x1a0] sm:$0xff]
    %v121 = vld [vmem:[#allocation5 + $0x1a8] sm:$0xff]
    %v122 = vld [vmem:[#allocation5 + $0x1b0] sm:$0xff]
    %v123 = vld [vmem:[#allocation5 + $0x1b8] sm:$0xff]
    %v124 = vld [vmem:[#allocation5 + $0x1c0] sm:$0xff]
    %v125 = vld [vmem:[#allocation5 + $0x1c8] sm:$0xff]
    %v126 = vld [vmem:[#allocation5 + $0x1d0] sm:$0xff]
    %v127 = vld [vmem:[#allocation5 + $0x1d8] sm:$0xff]
    %v128 = vld [vmem:[#allocation5 + $0x1e0] sm:$0xff]
    %v129 = vld [vmem:[#allocation5 + $0x1e8] sm:$0xff]
    %v130 = vld [vmem:[#allocation5 + $0x1f0] sm:$0xff]
    %v131 = vld [vmem:[#allocation5 + $0x1f8] sm:$0xff]
    %v132 = vld [vmem:[#allocation5 + $0x200] sm:$0xff]
    %v133 = vld [vmem:[#allocation5 + $0x208] sm:$0xff]
    %v134 = vld [vmem:[#allocation5 + $0x210] sm:$0xff]
    %v135 = vld [vmem:[#allocation5 + $0x218] sm:$0xff]
    %v136 = vld [vmem:[#allocation5 + $0x220] sm:$0xff]
    %v137 = vld [vmem:[#allocation5 + $0x228] sm:$0xff]
    %v138 = vld [vmem:[#allocation5 + $0x230] sm:$0xff]
    %v139 = vld [vmem:[#allocation5 + $0x238] sm:$0xff]
    %v140 = vld [vmem:[#allocation5 + $0x240] sm:$0xff]
    %v141 = vld [vmem:[#allocation5 + $0x248] sm:$0xff]
    %v142 = vld [vmem:[#allocation5 + $0x250] sm:$0xff]
    %v143 = vld [vmem:[#allocation5 + $0x258] sm:$0xff]
    %v144 = vld [vmem:[#allocation5 + $0x260] sm:$0xff]
    %v145 = vld [vmem:[#allocation5 + $0x268] sm:$0xff]
    %v146 = vld [vmem:[#allocation5 + $0x270] sm:$0xff]
    %v147 = vld [vmem:[#allocation5 + $0x278] sm:$0xff]
    %v148 = vld [vmem:[#allocation5 + $0x280] sm:$0xff]
    %v149 = vld [vmem:[#allocation5 + $0x288] sm:$0xff]
    %v150 = vld [vmem:[#allocation5 + $0x290] sm:$0xff]
    %v151 = vld [vmem:[#allocation5 + $0x298] sm:$0xff]
    %v152 = vld [vmem:[#allocation5 + $0x2a0] sm:$0xff]
    %v153 = vld [vmem:[#allocation5 + $0x2a8] sm:$0xff]
    %v154 = vld [vmem:[#allocation5 + $0x2b0] sm:$0xff]
    %v155 = vld [vmem:[#allocation5 + $0x2b8] sm:$0xff]
    %v156 = vld [vmem:[#allocation5 + $0x2c0] sm:$0xff]
    %v157 = vld [vmem:[#allocation5 + $0x2c8] sm:$0xff]
    %v158 = vld [vmem:[#allocation5 + $0x2d0] sm:$0xff]
    %v159 = vld [vmem:[#allocation5 + $0x2d8] sm:$0xff]
    %v160 = vld [vmem:[#allocation5 + $0x2e0] sm:$0xff]
    %v161 = vld [vmem:[#allocation5 + $0x2e8] sm:$0xff]
    %v162 = vld [vmem:[#allocation5 + $0x2f0] sm:$0xff]
    %v163 = vld [vmem:[#allocation5 + $0x2f8] sm:$0xff]
    %v164 = vld [vmem:[#allocation5 + $0x300] sm:$0xff]
    %v165 = vld [vmem:[#allocation5 + $0x308] sm:$0xff]
    %v166 = vld [vmem:[#allocation5 + $0x310] sm:$0xff]
    %v167 = vld [vmem:[#allocation5 + $0x318] sm:$0xff]
    %v168 = vld [vmem:[#allocation5 + $0x320] sm:$0xff]
    %v169 = vld [vmem:[#allocation5 + $0x328] sm:$0xff]
    %v170 = vld [vmem:[#allocation5 + $0x330] sm:$0xff]
    %v171 = vld [vmem:[#allocation5 + $0x338] sm:$0xff]
    %v172 = vld [vmem:[#allocation5 + $0x340] sm:$0xff]
    %v173 = vld [vmem:[#allocation5 + $0x348] sm:$0xff]
    %v174 = vld [vmem:[#allocation5 + $0x350] sm:$0xff]
    %v175 = vld [vmem:[#allocation5 + $0x358] sm:$0xff]
    %v176 = vld [vmem:[#allocation5 + $0x360] sm:$0xff]
    %v177 = vld [vmem:[#allocation5 + $0x368] sm:$0xff]
    %v178 = vld [vmem:[#allocation5 + $0x370] sm:$0xff]
    %v179 = vld [vmem:[#allocation5 + $0x378] sm:$0xff]
    %v180 = vld [vmem:[#allocation5 + $0x380] sm:$0xff]
    %v181 = vld [vmem:[#allocation5 + $0x388] sm:$0xff]
    %v182 = vld [vmem:[#allocation5 + $0x390] sm:$0xff]
    %v183 = vld [vmem:[#allocation5 + $0x398] sm:$0xff]
    %v184 = vld [vmem:[#allocation5 + $0x3a0] sm:$0xff]
    %v185 = vld [vmem:[#allocation5 + $0x3a8] sm:$0xff]
    %v186 = vld [vmem:[#allocation5 + $0x3b0] sm:$0xff]
    %v187 = vld [vmem:[#allocation5 + $0x3b8] sm:$0xff]
    %v188 = vld [vmem:[#allocation5 + $0x3c0] sm:$0xff]
    %v189 = vld [vmem:[#allocation5 + $0x3c8] sm:$0xff]
    %v190 = vld [vmem:[#allocation5 + $0x3d0] sm:$0xff]
    %v191 = vld [vmem:[#allocation5 + $0x3d8] sm:$0xff]
    %v192 = vld [vmem:[#allocation5 + $0x3e0] sm:$0xff]
    %v193 = vld [vmem:[#allocation5 + $0x3e8] sm:$0xff]
    %v194 = vld [vmem:[#allocation5 + $0x3f0] sm:$0xff]
    %v195 = vld [vmem:[#allocation5 + $0x3f8] sm:$0xff]
    %v196 = vld [vmem:[#allocation5 + $0x400] sm:$0xff]
    %v197 = vld [vmem:[#allocation5 + $0x408] sm:$0xff]
    %v198 = vld [vmem:[#allocation5 + $0x410] sm:$0xff]
    %v199 = vld [vmem:[#allocation5 + $0x418] sm:$0xff]
    %v200 = vld [vmem:[#allocation5 + $0x420] sm:$0xff]
    %v201 = vld [vmem:[#allocation5 + $0x428] sm:$0xff]
    %v202 = vld [vmem:[#allocation5 + $0x430] sm:$0xff]
    %v203 = vld [vmem:[#allocation5 + $0x438] sm:$0xff]
    %v204 = vld [vmem:[#allocation5 + $0x440] sm:$0xff]
    %v205 = vld [vmem:[#allocation5 + $0x448] sm:$0xff]
    %v206 = vld [vmem:[#allocation5 + $0x450] sm:$0xff]
    %v207 = vld [vmem:[#allocation5 + $0x458] sm:$0xff]
    %v208 = vld [vmem:[#allocation5 + $0x460] sm:$0xff]
    %v209 = vld [vmem:[#allocation5 + $0x468] sm:$0xff]
    %v210 = vld [vmem:[#allocation5 + $0x470] sm:$0xff]
    %v211 = vld [vmem:[#allocation5 + $0x478] sm:$0xff]
    %v212 = vld [vmem:[#allocation5 + $0x480] sm:$0xff]
    %v213 = vld [vmem:[#allocation5 + $0x488] sm:$0xff]
    %v214 = vld [vmem:[#allocation5 + $0x490] sm:$0xff]
    %v215 = vld [vmem:[#allocation5 + $0x498] sm:$0xff]
    %v216 = vld [vmem:[#allocation5 + $0x4a0] sm:$0xff]
    %v217 = vld [vmem:[#allocation5 + $0x4a8] sm:$0xff]
    %v218 = vld [vmem:[#allocation5 + $0x4b0] sm:$0xff]
    %v219 = vld [vmem:[#allocation5 + $0x4b8] sm:$0xff]
    %v220 = vld [vmem:[#allocation5 + $0x4c0] sm:$0xff]
    %v221 = vld [vmem:[#allocation5 + $0x4c8] sm:$0xff]
    %v222 = vld [vmem:[#allocation5 + $0x4d0] sm:$0xff]
    %v223 = vld [vmem:[#allocation5 + $0x4d8] sm:$0xff]
    %v224 = vld [vmem:[#allocation5 + $0x4e0] sm:$0xff]
    %v225 = vld [vmem:[#allocation5 + $0x4e8] sm:$0xff]
    %v226 = vld [vmem:[#allocation5 + $0x4f0] sm:$0xff]
    %v227 = vld [vmem:[#allocation5 + $0x4f8] sm:$0xff]
    %v228 = vld [vmem:[#allocation5 + $0x500] sm:$0xff]
    %v229 = vld [vmem:[#allocation5 + $0x508] sm:$0xff]
    %v230 = vld [vmem:[#allocation5 + $0x510] sm:$0xff]
    %v231 = vld [vmem:[#allocation5 + $0x518] sm:$0xff]
    %v232 = vld [vmem:[#allocation5 + $0x520] sm:$0xff]
    %v233 = vld [vmem:[#allocation5 + $0x528] sm:$0xff]
    %v234 = vld [vmem:[#allocation5 + $0x530] sm:$0xff]
    %v235 = vld [vmem:[#allocation5 + $0x538] sm:$0xff]
    %v236 = vld [vmem:[#allocation5 + $0x540] sm:$0xff]
    %v237 = vld [vmem:[#allocation5 + $0x548] sm:$0xff]
    %v238 = vld [vmem:[#allocation5 + $0x550] sm:$0xff]
    %v239 = vld [vmem:[#allocation5 + $0x558] sm:$0xff]
    %v240 = vld [vmem:[#allocation5 + $0x560] sm:$0xff]
    %v241 = vld [vmem:[#allocation5 + $0x568] sm:$0xff]
    %v242 = vld [vmem:[#allocation5 + $0x570] sm:$0xff]
    %v243 = vld [vmem:[#allocation5 + $0x578] sm:$0xff]
    %v244 = vld [vmem:[#allocation5 + $0x580] sm:$0xff]
    %v245 = vld [vmem:[#allocation5 + $0x588] sm:$0xff]
    %v246 = vld [vmem:[#allocation5 + $0x590] sm:$0xff]
    %v247 = vld [vmem:[#allocation5 + $0x598] sm:$0xff]
    %v248 = vld [vmem:[#allocation5 + $0x5a0] sm:$0xff]
    %v249 = vld [vmem:[#allocation5 + $0x5a8] sm:$0xff]
    %v250 = vld [vmem:[#allocation5 + $0x5b0] sm:$0xff]
    %v251 = vld [vmem:[#allocation5 + $0x5b8] sm:$0xff]
    %v252 = vld [vmem:[#allocation5 + $0x5c0] sm:$0xff]
    %v253 = vld [vmem:[#allocation5 + $0x5c8] sm:$0xff]
    %v254 = vld [vmem:[#allocation5 + $0x5d0] sm:$0xff]
    %v255 = vld [vmem:[#allocation5 + $0x5d8] sm:$0xff]
    %v256 = vld [vmem:[#allocation5 + $0x5e0] sm:$0xff]
    %v257 = vld [vmem:[#allocation5 + $0x5e8] sm:$0xff]
    %v258 = vld [vmem:[#allocation5 + $0x5f0] sm:$0xff]
    %v259 = vld [vmem:[#allocation5 + $0x5f8] sm:$0xff]
    %v260 = vld [vmem:[#allocation5 + $0x600] sm:$0xff]
    %v261 = vld [vmem:[#allocation5 + $0x608] sm:$0xff]
    %v262 = vld [vmem:[#allocation5 + $0x610] sm:$0xff]
    %v263 = vld [vmem:[#allocation5 + $0x618] sm:$0xff]
    %v264 = vld [vmem:[#allocation5 + $0x620] sm:$0xff]
    %v265 = vld [vmem:[#allocation5 + $0x628] sm:$0xff]
    %v266 = vld [vmem:[#allocation5 + $0x630] sm:$0xff]
    %v267 = vld [vmem:[#allocation5 + $0x638] sm:$0xff]
    %v268 = vld [vmem:[#allocation5 + $0x640] sm:$0xff]
    %v269 = vld [vmem:[#allocation5 + $0x648] sm:$0xff]
    %v270 = vld [vmem:[#allocation5 + $0x650] sm:$0xff]
    %v271 = vld [vmem:[#allocation5 + $0x658] sm:$0xff]
    %v272 = vld [vmem:[#allocation5 + $0x660] sm:$0xff]
    %v273 = vld [vmem:[#allocation5 + $0x668] sm:$0xff]
    %v274 = vld [vmem:[#allocation5 + $0x670] sm:$0xff]
    %v275 = vld [vmem:[#allocation5 + $0x678] sm:$0xff]
    %v276 = vld [vmem:[#allocation5 + $0x680] sm:$0xff]
    %v277 = vld [vmem:[#allocation5 + $0x688] sm:$0xff]
    %v278 = vld [vmem:[#allocation5 + $0x690] sm:$0xff]
    %v279 = vld [vmem:[#allocation5 + $0x698] sm:$0xff]
    %v280 = vld [vmem:[#allocation5 + $0x6a0] sm:$0xff]
    %v281 = vld [vmem:[#allocation5 + $0x6a8] sm:$0xff]
    %v282 = vld [vmem:[#allocation5 + $0x6b0] sm:$0xff]
    %v283 = vld [vmem:[#allocation5 + $0x6b8] sm:$0xff]
    %v284 = vld [vmem:[#allocation5 + $0x6c0] sm:$0xff]
    %v285 = vld [vmem:[#allocation5 + $0x6c8] sm:$0xff]
    %v286 = vld [vmem:[#allocation5 + $0x6d0] sm:$0xff]
    %v287 = vld [vmem:[#allocation5 + $0x6d8] sm:$0xff]
    %v288 = vld [vmem:[#allocation5 + $0x6e0] sm:$0xff]
    %v289 = vld [vmem:[#allocation5 + $0x6e8] sm:$0xff]
    %v290 = vld [vmem:[#allocation5 + $0x6f0] sm:$0xff]
    %v291 = vld [vmem:[#allocation5 + $0x6f8] sm:$0xff]
    %v292 = vld [vmem:[#allocation5 + $0x700] sm:$0xff]
    %v293 = vld [vmem:[#allocation5 + $0x708] sm:$0xff]
    %v294 = vld [vmem:[#allocation5 + $0x710] sm:$0xff]
    %v295 = vld [vmem:[#allocation5 + $0x718] sm:$0xff]
    %v296 = vld [vmem:[#allocation5 + $0x720] sm:$0xff]
    %v297 = vld [vmem:[#allocation5 + $0x728] sm:$0xff]
    %v298 = vld [vmem:[#allocation5 + $0x730] sm:$0xff]
    %v299 = vld [vmem:[#allocation5 + $0x738] sm:$0xff]
    %v300 = vld [vmem:[#allocation5 + $0x740] sm:$0xff]
    %v301 = vld [vmem:[#allocation5 + $0x748] sm:$0xff]
    %v302 = vld [vmem:[#allocation5 + $0x750] sm:$0xff]
    %v303 = vld [vmem:[#allocation5 + $0x758] sm:$0xff]
    %v304 = vld [vmem:[#allocation5 + $0x760] sm:$0xff]
    %v305 = vld [vmem:[#allocation5 + $0x768] sm:$0xff]
    %v306 = vld [vmem:[#allocation5 + $0x770] sm:$0xff]
    %v307 = vld [vmem:[#allocation5 + $0x778] sm:$0xff]
    %v308 = vld [vmem:[#allocation5 + $0x780] sm:$0xff]
    %v309 = vld [vmem:[#allocation5 + $0x788] sm:$0xff]
    %v310 = vld [vmem:[#allocation5 + $0x790] sm:$0xff]
    %v311 = vld [vmem:[#allocation5 + $0x798] sm:$0xff]
    %v312 = vld [vmem:[#allocation5 + $0x7a0] sm:$0xff]
    %v313 = vld [vmem:[#allocation5 + $0x7a8] sm:$0xff]
    %v314 = vld [vmem:[#allocation5 + $0x7b0] sm:$0xff]
    %v315 = vld [vmem:[#allocation5 + $0x7b8] sm:$0xff]
    %v316 = vld [vmem:[#allocation5 + $0x7c0] sm:$0xff]
    %v317 = vld [vmem:[#allocation5 + $0x7c8] sm:$0xff]
    %v318 = vld [vmem:[#allocation5 + $0x7d0] sm:$0xff]
    %v319 = vld [vmem:[#allocation5 + $0x7d8] sm:$0xff]
    %v320 = vld [vmem:[#allocation5 + $0x7e0] sm:$0xff]
    %v321 = vld [vmem:[#allocation5 + $0x7e8] sm:$0xff]
    %v322 = vld [vmem:[#allocation5 + $0x7f0] sm:$0xff]
    %v323 = vld [vmem:[#allocation5 + $0x7f8] sm:$0xff]
    %v324 = vld [vmem:[%s2] sm:$0x1]
    %v327 = vlaneseq
    %v328 = vshrl.u32 %v327, 7
    %v329 = vsub.s32 0, %v328
    %v330 = vrot.slane %v66, %v329
    %v331 = vlaneseq
    %v332 = vshrl.u32 %v331, 7
    %v333 = vsub.s32 1, %v332
    %v334 = vrot.slane %v66, %v333
    %v335 = vlaneseq
    %v336 = vshrl.u32 %v335, 7
    %v337 = vsub.s32 2, %v336
    %v338 = vrot.slane %v66, %v337
    %v339 = vlaneseq
    %v340 = vshrl.u32 %v339, 7
    %v341 = vsub.s32 3, %v340
    %v342 = vrot.slane %v66, %v341
    %v343 = vlaneseq
    %v344 = vshrl.u32 %v343, 7
    %v345 = vsub.s32 4, %v344
    %v346 = vrot.slane %v66, %v345
    %v347 = vlaneseq
    %v348 = vshrl.u32 %v347, 7
    %v349 = vsub.s32 5, %v348
    %v350 = vrot.slane %v66, %v349
    %v351 = vlaneseq
    %v352 = vshrl.u32 %v351, 7
    %v353 = vsub.s32 6, %v352
    %v354 = vrot.slane %v66, %v353
    %v355 = vlaneseq
    %v356 = vshrl.u32 %v355, 7
    %v357 = vsub.s32 7, %v356
    %v358 = vrot.slane %v66, %v357
    %v359 = vlaneseq
    %v360 = vshrl.u32 %v359, 7
    %v361 = vsub.s32 0, %v360
    %v362 = vrot.slane %v67, %v361
    %v363 = vlaneseq
    %v364 = vshrl.u32 %v363, 7
    %v365 = vsub.s32 1, %v364
    %v366 = vrot.slane %v67, %v365
    %v367 = vlaneseq
    %v368 = vshrl.u32 %v367, 7
    %v369 = vsub.s32 2, %v368
    %v370 = vrot.slane %v67, %v369
    %v371 = vlaneseq
    %v372 = vshrl.u32 %v371, 7
    %v373 = vsub.s32 3, %v372
    %v374 = vrot.slane %v67, %v373
    %v375 = vlaneseq
    %v376 = vshrl.u32 %v375, 7
    %v377 = vsub.s32 4, %v376
    %v378 = vrot.slane %v67, %v377
    %v379 = vlaneseq
    %v380 = vshrl.u32 %v379, 7
    %v381 = vsub.s32 5, %v380
    %v382 = vrot.slane %v67, %v381
    %v383 = vlaneseq
    %v384 = vshrl.u32 %v383, 7
    %v385 = vsub.s32 6, %v384
    %v386 = vrot.slane %v67, %v385
    %v387 = vlaneseq
    %v388 = vshrl.u32 %v387, 7
    %v389 = vsub.s32 7, %v388
    %v390 = vrot.slane %v67, %v389
    %407 = vmatprep.subr.mxu0 0.0
    %408 = vmatpush1.msra.mxu0 %v68
    %409 = vmatprep.subr.mxu0 0.0
    %410 = vmatpush1.msra.mxu0 %v69
    %411 = vmatprep.subr.mxu0 0.0
    %412 = vmatpush1.msra.mxu0 %v70
    %413 = vmatprep.subr.mxu0 0.0
    %414 = vmatpush1.msra.mxu0 %v71
    %415 = vmatprep.subr.mxu0 0.0
    %416 = vmatpush1.msra.mxu0 %v72
    %417 = vmatprep.subr.mxu0 0.0
    %418 = vmatpush1.msra.mxu0 %v73
    %419 = vmatprep.subr.mxu0 0.0
    %420 = vmatpush1.msra.mxu0 %v74
    %421 = vmatprep.subr.mxu0 0.0
    %422 = vmatpush1.msra.mxu0 %v75
    %423 = vmatprep.subr.mxu0 0.0
    %424 = vmatpush1.msra.mxu0 %v76
    %425 = vmatprep.subr.mxu0 0.0
    %426 = vmatpush1.msra.mxu0 %v77
    %427 = vmatprep.subr.mxu0 0.0
    %428 = vmatpush1.msra.mxu0 %v78
    %429 = vmatprep.subr.mxu0 0.0
    %430 = vmatpush1.msra.mxu0 %v79
    %431 = vmatprep.subr.mxu0 0.0
    %432 = vmatpush1.msra.mxu0 %v80
    %433 = vmatprep.subr.mxu0 0.0
    %434 = vmatpush1.msra.mxu0 %v81
    %435 = vmatprep.subr.mxu0 0.0
    %436 = vmatpush1.msra.mxu0 %v82
    %437 = vmatprep.subr.mxu0 0.0
    %438 = vmatpush1.msra.mxu0 %v83
    %439 = vmatprep.subr.mxu0 0.0
    %440 = vmatpush1.msra.mxu0 %v84
    %441 = vmatprep.subr.mxu0 0.0
    %442 = vmatpush1.msra.mxu0 %v85
    %443 = vmatprep.subr.mxu0 0.0
    %444 = vmatpush1.msra.mxu0 %v86
    %445 = vmatprep.subr.mxu0 0.0
    %446 = vmatpush1.msra.mxu0 %v87
    %447 = vmatprep.subr.mxu0 0.0
    %448 = vmatpush1.msra.mxu0 %v88
    %449 = vmatprep.subr.mxu0 0.0
    %450 = vmatpush1.msra.mxu0 %v89
    %451 = vmatprep.subr.mxu0 0.0
    %452 = vmatpush1.msra.mxu0 %v90
    %453 = vmatprep.subr.mxu0 0.0
    %454 = vmatpush1.msra.mxu0 %v91
    %455 = vmatprep.subr.mxu0 0.0
    %456 = vmatpush1.msra.mxu0 %v92
    %457 = vmatprep.subr.mxu0 0.0
    %458 = vmatpush1.msra.mxu0 %v93
    %459 = vmatprep.subr.mxu0 0.0
    %460 = vmatpush1.msra.mxu0 %v94
    %461 = vmatprep.subr.mxu0 0.0
    %462 = vmatpush1.msra.mxu0 %v95
    %463 = vmatprep.subr.mxu0 0.0
    %464 = vmatpush1.msra.mxu0 %v96
    %465 = vmatprep.subr.mxu0 0.0
    %466 = vmatpush1.msra.mxu0 %v97
    %467 = vmatprep.subr.mxu0 0.0
    %468 = vmatpush1.msra.mxu0 %v98
    %469 = vmatprep.subr.mxu0 0.0
    %470 = vmatpush1.msra.mxu0 %v99
    %471 = vmatprep.mubr.f32.mxu0 %v334
    %472 = vmatmul.mubr.f32.gmra.mrb[0].mxu0 %v330
    %v473 = vpop.f32.mrb[0].mxu0
    %v474 = vadd.f32 %v324, %v473
    %v475 = vpop.f32.mrb[0].mxu0
    %476 = vdwg.mxu0
    %477 = vmatprep.subr.mxu0 0.0
    %478 = vmatpush1.msra.mxu0 %v100
    %479 = vmatprep.subr.mxu0 0.0
    %480 = vmatpush1.msra.mxu0 %v101
    %481 = vmatprep.subr.mxu0 0.0
    %482 = vmatpush1.msra.mxu0 %v102
    %483 = vmatprep.subr.mxu0 0.0
    %484 = vmatpush1.msra.mxu0 %v103
    %485 = vmatprep.subr.mxu0 0.0
    %486 = vmatpush1.msra.mxu0 %v104
    %487 = vmatprep.subr.mxu0 0.0
    %488 = vmatpush1.msra.mxu0 %v105
    %489 = vmatprep.subr.mxu0 0.0
    %490 = vmatpush1.msra.mxu0 %v106
    %491 = vmatprep.subr.mxu0 0.0
    %492 = vmatpush1.msra.mxu0 %v107
    %493 = vmatprep.subr.mxu0 0.0
    %494 = vmatpush1.msra.mxu0 %v108
    %495 = vmatprep.subr.mxu0 0.0
    %496 = vmatpush1.msra.mxu0 %v109
    %497 = vmatprep.subr.mxu0 0.0
    %498 = vmatpush1.msra.mxu0 %v110
    %499 = vmatprep.subr.mxu0 0.0
    %500 = vmatpush1.msra.mxu0 %v111
    %501 = vmatprep.subr.mxu0 0.0
    %502 = vmatpush1.msra.mxu0 %v112
    %503 = vmatprep.subr.mxu0 0.0
    %504 = vmatpush1.msra.mxu0 %v113
    %505 = vmatprep.subr.mxu0 0.0
    %506 = vmatpush1.msra.mxu0 %v114
    %507 = vmatprep.subr.mxu0 0.0
    %508 = vmatpush1.msra.mxu0 %v115
    %509 = vmatprep.subr.mxu0 0.0
    %510 = vmatpush1.msra.mxu0 %v116
    %511 = vmatprep.subr.mxu0 0.0
    %512 = vmatpush1.msra.mxu0 %v117
    %513 = vmatprep.subr.mxu0 0.0
    %514 = vmatpush1.msra.mxu0 %v118
    %515 = vmatprep.subr.mxu0 0.0
    %516 = vmatpush1.msra.mxu0 %v119
    %517 = vmatprep.subr.mxu0 0.0
    %518 = vmatpush1.msra.mxu0 %v120
    %519 = vmatprep.subr.mxu0 0.0
    %520 = vmatpush1.msra.mxu0 %v121
    %521 = vmatprep.subr.mxu0 0.0
    %522 = vmatpush1.msra.mxu0 %v122
    %523 = vmatprep.subr.mxu0 0.0
    %524 = vmatpush1.msra.mxu0 %v123
    %525 = vmatprep.subr.mxu0 0.0
    %526 = vmatpush1.msra.mxu0 %v124
    %527 = vmatprep.subr.mxu0 0.0
    %528 = vmatpush1.msra.mxu0 %v125
    %529 = vmatprep.subr.mxu0 0.0
    %530 = vmatpush1.msra.mxu0 %v126
    %531 = vmatprep.subr.mxu0 0.0
    %532 = vmatpush1.msra.mxu0 %v127
    %533 = vmatprep.subr.mxu0 0.0
    %534 = vmatpush1.msra.mxu0 %v128
    %535 = vmatprep.subr.mxu0 0.0
    %536 = vmatpush1.msra.mxu0 %v129
    %537 = vmatprep.subr.mxu0 0.0
    %538 = vmatpush1.msra.mxu0 %v130
    %539 = vmatprep.subr.mxu0 0.0
    %540 = vmatpush1.msra.mxu0 %v131
    %541 = vmatprep.mubr.f32.mxu0 %v342
    %542 = vmatmul.mubr.f32.gmra.mrb[0].mxu0 %v338
    %v543 = vpop.f32.mrb[0].mxu0
    %v544 = vadd.f32 %v474, %v543
    %v545 = vpop.f32.mrb[0].mxu0
    %546 = vdwg.mxu0
    %547 = vmatprep.subr.mxu0 0.0
    %548 = vmatpush1.msra.mxu0 %v132
    %549 = vmatprep.subr.mxu0 0.0
    %550 = vmatpush1.msra.mxu0 %v133
    %551 = vmatprep.subr.mxu0 0.0
    %552 = vmatpush1.msra.mxu0 %v134
    %553 = vmatprep.subr.mxu0 0.0
    %554 = vmatpush1.msra.mxu0 %v135
    %555 = vmatprep.subr.mxu0 0.0
    %556 = vmatpush1.msra.mxu0 %v136
    %557 = vmatprep.subr.mxu0 0.0
    %558 = vmatpush1.msra.mxu0 %v137
    %559 = vmatprep.subr.mxu0 0.0
    %560 = vmatpush1.msra.mxu0 %v138
    %561 = vmatprep.subr.mxu0 0.0
    %562 = vmatpush1.msra.mxu0 %v139
    %563 = vmatprep.subr.mxu0 0.0
    %564 = vmatpush1.msra.mxu0 %v140
    %565 = vmatprep.subr.mxu0 0.0
    %566 = vmatpush1.msra.mxu0 %v141
    %567 = vmatprep.subr.mxu0 0.0
    %568 = vmatpush1.msra.mxu0 %v142
    %569 = vmatprep.subr.mxu0 0.0
    %570 = vmatpush1.msra.mxu0 %v143
    %571 = vmatprep.subr.mxu0 0.0
    %572 = vmatpush1.msra.mxu0 %v144
    %573 = vmatprep.subr.mxu0 0.0
    %574 = vmatpush1.msra.mxu0 %v145
    %575 = vmatprep.subr.mxu0 0.0
    %576 = vmatpush1.msra.mxu0 %v146
    %577 = vmatprep.subr.mxu0 0.0
    %578 = vmatpush1.msra.mxu0 %v147
    %579 = vmatprep.subr.mxu0 0.0
    %580 = vmatpush1.msra.mxu0 %v148
    %581 = vmatprep.subr.mxu0 0.0
    %582 = vmatpush1.msra.mxu0 %v149
    %583 = vmatprep.subr.mxu0 0.0
    %584 = vmatpush1.msra.mxu0 %v150
    %585 = vmatprep.subr.mxu0 0.0
    %586 = vmatpush1.msra.mxu0 %v151
    %587 = vmatprep.subr.mxu0 0.0
    %588 = vmatpush1.msra.mxu0 %v152
    %589 = vmatprep.subr.mxu0 0.0
    %590 = vmatpush1.msra.mxu0 %v153
    %591 = vmatprep.subr.mxu0 0.0
    %592 = vmatpush1.msra.mxu0 %v154
    %593 = vmatprep.subr.mxu0 0.0
    %594 = vmatpush1.msra.mxu0 %v155
    %595 = vmatprep.subr.mxu0 0.0
    %596 = vmatpush1.msra.mxu0 %v156
    %597 = vmatprep.subr.mxu0 0.0
    %598 = vmatpush1.msra.mxu0 %v157
    %599 = vmatprep.subr.mxu0 0.0
    %600 = vmatpush1.msra.mxu0 %v158
    %601 = vmatprep.subr.mxu0 0.0
    %602 = vmatpush1.msra.mxu0 %v159
    %603 = vmatprep.subr.mxu0 0.0
    %604 = vmatpush1.msra.mxu0 %v160
    %605 = vmatprep.subr.mxu0 0.0
    %606 = vmatpush1.msra.mxu0 %v161
    %607 = vmatprep.subr.mxu0 0.0
    %608 = vmatpush1.msra.mxu0 %v162
    %609 = vmatprep.subr.mxu0 0.0
    %610 = vmatpush1.msra.mxu0 %v163
    %611 = vmatprep.mubr.f32.mxu0 %v350
    %612 = vmatmul.mubr.f32.gmra.mrb[0].mxu0 %v346
    %v613 = vpop.f32.mrb[0].mxu0
    %v614 = vadd.f32 %v544, %v613
    %v615 = vpop.f32.mrb[0].mxu0
    %616 = vdwg.mxu0
    %617 = vmatprep.subr.mxu0 0.0
    %618 = vmatpush1.msra.mxu0 %v164
    %619 = vmatprep.subr.mxu0 0.0
    %620 = vmatpush1.msra.mxu0 %v165
    %621 = vmatprep.subr.mxu0 0.0
    %622 = vmatpush1.msra.mxu0 %v166
    %623 = vmatprep.subr.mxu0 0.0
    %624 = vmatpush1.msra.mxu0 %v167
    %625 = vmatprep.subr.mxu0 0.0
    %626 = vmatpush1.msra.mxu0 %v168
    %627 = vmatprep.subr.mxu0 0.0
    %628 = vmatpush1.msra.mxu0 %v169
    %629 = vmatprep.subr.mxu0 0.0
    %630 = vmatpush1.msra.mxu0 %v170
    %631 = vmatprep.subr.mxu0 0.0
    %632 = vmatpush1.msra.mxu0 %v171
    %633 = vmatprep.subr.mxu0 0.0
    %634 = vmatpush1.msra.mxu0 %v172
    %635 = vmatprep.subr.mxu0 0.0
    %636 = vmatpush1.msra.mxu0 %v173
    %637 = vmatprep.subr.mxu0 0.0
    %638 = vmatpush1.msra.mxu0 %v174
    %639 = vmatprep.subr.mxu0 0.0
    %640 = vmatpush1.msra.mxu0 %v175
    %641 = vmatprep.subr.mxu0 0.0
    %642 = vmatpush1.msra.mxu0 %v176
    %643 = vmatprep.subr.mxu0 0.0
    %644 = vmatpush1.msra.mxu0 %v177
    %645 = vmatprep.subr.mxu0 0.0
    %646 = vmatpush1.msra.mxu0 %v178
    %647 = vmatprep.subr.mxu0 0.0
    %648 = vmatpush1.msra.mxu0 %v179
    %649 = vmatprep.subr.mxu0 0.0
    %650 = vmatpush1.msra.mxu0 %v180
    %651 = vmatprep.subr.mxu0 0.0
    %652 = vmatpush1.msra.mxu0 %v181
    %653 = vmatprep.subr.mxu0 0.0
    %654 = vmatpush1.msra.mxu0 %v182
    %655 = vmatprep.subr.mxu0 0.0
    %656 = vmatpush1.msra.mxu0 %v183
    %657 = vmatprep.subr.mxu0 0.0
    %658 = vmatpush1.msra.mxu0 %v184
    %659 = vmatprep.subr.mxu0 0.0
    %660 = vmatpush1.msra.mxu0 %v185
    %661 = vmatprep.subr.mxu0 0.0
    %662 = vmatpush1.msra.mxu0 %v186
    %663 = vmatprep.subr.mxu0 0.0
    %664 = vmatpush1.msra.mxu0 %v187
    %665 = vmatprep.subr.mxu0 0.0
    %666 = vmatpush1.msra.mxu0 %v188
    %667 = vmatprep.subr.mxu0 0.0
    %668 = vmatpush1.msra.mxu0 %v189
    %669 = vmatprep.subr.mxu0 0.0
    %670 = vmatpush1.msra.mxu0 %v190
    %671 = vmatprep.subr.mxu0 0.0
    %672 = vmatpush1.msra.mxu0 %v191
    %673 = vmatprep.subr.mxu0 0.0
    %674 = vmatpush1.msra.mxu0 %v192
    %675 = vmatprep.subr.mxu0 0.0
    %676 = vmatpush1.msra.mxu0 %v193
    %677 = vmatprep.subr.mxu0 0.0
    %678 = vmatpush1.msra.mxu0 %v194
    %679 = vmatprep.subr.mxu0 0.0
    %680 = vmatpush1.msra.mxu0 %v195
    %681 = vmatprep.mubr.f32.mxu0 %v358
    %682 = vmatmul.mubr.f32.gmra.mrb[0].mxu0 %v354
    %v683 = vpop.f32.mrb[0].mxu0
    %v684 = vadd.f32 %v614, %v683
    %v685 = vpop.f32.mrb[0].mxu0
    %686 = vdwg.mxu0
    %687 = vmatprep.subr.mxu0 0.0
    %688 = vmatpush1.msra.mxu0 %v196
    %689 = vmatprep.subr.mxu0 0.0
    %690 = vmatpush1.msra.mxu0 %v197
    %691 = vmatprep.subr.mxu0 0.0
    %692 = vmatpush1.msra.mxu0 %v198
    %693 = vmatprep.subr.mxu0 0.0
    %694 = vmatpush1.msra.mxu0 %v199
    %695 = vmatprep.subr.mxu0 0.0
    %696 = vmatpush1.msra.mxu0 %v200
    %697 = vmatprep.subr.mxu0 0.0
    %698 = vmatpush1.msra.mxu0 %v201
    %699 = vmatprep.subr.mxu0 0.0
    %700 = vmatpush1.msra.mxu0 %v202
    %701 = vmatprep.subr.mxu0 0.0
    %702 = vmatpush1.msra.mxu0 %v203
    %703 = vmatprep.subr.mxu0 0.0
    %704 = vmatpush1.msra.mxu0 %v204
    %705 = vmatprep.subr.mxu0 0.0
    %706 = vmatpush1.msra.mxu0 %v205
    %707 = vmatprep.subr.mxu0 0.0
    %708 = vmatpush1.msra.mxu0 %v206
    %709 = vmatprep.subr.mxu0 0.0
    %710 = vmatpush1.msra.mxu0 %v207
    %711 = vmatprep.subr.mxu0 0.0
    %712 = vmatpush1.msra.mxu0 %v208
    %713 = vmatprep.subr.mxu0 0.0
    %714 = vmatpush1.msra.mxu0 %v209
    %715 = vmatprep.subr.mxu0 0.0
    %716 = vmatpush1.msra.mxu0 %v210
    %717 = vmatprep.subr.mxu0 0.0
    %718 = vmatpush1.msra.mxu0 %v211
    %719 = vmatprep.subr.mxu0 0.0
    %720 = vmatpush1.msra.mxu0 %v212
    %721 = vmatprep.subr.mxu0 0.0
    %722 = vmatpush1.msra.mxu0 %v213
    %723 = vmatprep.subr.mxu0 0.0
    %724 = vmatpush1.msra.mxu0 %v214
    %725 = vmatprep.subr.mxu0 0.0
    %726 = vmatpush1.msra.mxu0 %v215
    %727 = vmatprep.subr.mxu0 0.0
    %728 = vmatpush1.msra.mxu0 %v216
    %729 = vmatprep.subr.mxu0 0.0
    %730 = vmatpush1.msra.mxu0 %v217
    %731 = vmatprep.subr.mxu0 0.0
    %732 = vmatpush1.msra.mxu0 %v218
    %733 = vmatprep.subr.mxu0 0.0
    %734 = vmatpush1.msra.mxu0 %v219
    %735 = vmatprep.subr.mxu0 0.0
    %736 = vmatpush1.msra.mxu0 %v220
    %737 = vmatprep.subr.mxu0 0.0
    %738 = vmatpush1.msra.mxu0 %v221
    %739 = vmatprep.subr.mxu0 0.0
    %740 = vmatpush1.msra.mxu0 %v222
    %741 = vmatprep.subr.mxu0 0.0
    %742 = vmatpush1.msra.mxu0 %v223
    %743 = vmatprep.subr.mxu0 0.0
    %744 = vmatpush1.msra.mxu0 %v224
    %745 = vmatprep.subr.mxu0 0.0
    %746 = vmatpush1.msra.mxu0 %v225
    %747 = vmatprep.subr.mxu0 0.0
    %748 = vmatpush1.msra.mxu0 %v226
    %749 = vmatprep.subr.mxu0 0.0
    %750 = vmatpush1.msra.mxu0 %v227
    %751 = vmatprep.mubr.f32.mxu0 %v366
    %752 = vmatmul.mubr.f32.gmra.mrb[0].mxu0 %v362
    %v753 = vpop.f32.mrb[0].mxu0
    %v754 = vadd.f32 %v684, %v753
    %v755 = vpop.f32.mrb[0].mxu0
    %756 = vdwg.mxu0
    %757 = vmatprep.subr.mxu0 0.0
    %758 = vmatpush1.msra.mxu0 %v228
    %759 = vmatprep.subr.mxu0 0.0
    %760 = vmatpush1.msra.mxu0 %v229
    %761 = vmatprep.subr.mxu0 0.0
    %762 = vmatpush1.msra.mxu0 %v230
    %763 = vmatprep.subr.mxu0 0.0
    %764 = vmatpush1.msra.mxu0 %v231
    %765 = vmatprep.subr.mxu0 0.0
    %766 = vmatpush1.msra.mxu0 %v232
    %767 = vmatprep.subr.mxu0 0.0
    %768 = vmatpush1.msra.mxu0 %v233
    %769 = vmatprep.subr.mxu0 0.0
    %770 = vmatpush1.msra.mxu0 %v234
    %771 = vmatprep.subr.mxu0 0.0
    %772 = vmatpush1.msra.mxu0 %v235
    %773 = vmatprep.subr.mxu0 0.0
    %774 = vmatpush1.msra.mxu0 %v236
    %775 = vmatprep.subr.mxu0 0.0
    %776 = vmatpush1.msra.mxu0 %v237
    %777 = vmatprep.subr.mxu0 0.0
    %778 = vmatpush1.msra.mxu0 %v238
    %779 = vmatprep.subr.mxu0 0.0
    %780 = vmatpush1.msra.mxu0 %v239
    %781 = vmatprep.subr.mxu0 0.0
    %782 = vmatpush1.msra.mxu0 %v240
    %783 = vmatprep.subr.mxu0 0.0
    %784 = vmatpush1.msra.mxu0 %v241
    %785 = vmatprep.subr.mxu0 0.0
    %786 = vmatpush1.msra.mxu0 %v242
    %787 = vmatprep.subr.mxu0 0.0
    %788 = vmatpush1.msra.mxu0 %v243
    %789 = vmatprep.subr.mxu0 0.0
    %790 = vmatpush1.msra.mxu0 %v244
    %791 = vmatprep.subr.mxu0 0.0
    %792 = vmatpush1.msra.mxu0 %v245
    %793 = vmatprep.subr.mxu0 0.0
    %794 = vmatpush1.msra.mxu0 %v246
    %795 = vmatprep.subr.mxu0 0.0
    %796 = vmatpush1.msra.mxu0 %v247
    %797 = vmatprep.subr.mxu0 0.0
    %798 = vmatpush1.msra.mxu0 %v248
    %799 = vmatprep.subr.mxu0 0.0
    %800 = vmatpush1.msra.mxu0 %v249
    %801 = vmatprep.subr.mxu0 0.0
    %802 = vmatpush1.msra.mxu0 %v250
    %803 = vmatprep.subr.mxu0 0.0
    %804 = vmatpush1.msra.mxu0 %v251
    %805 = vmatprep.subr.mxu0 0.0
    %806 = vmatpush1.msra.mxu0 %v252
    %807 = vmatprep.subr.mxu0 0.0
    %808 = vmatpush1.msra.mxu0 %v253
    %809 = vmatprep.subr.mxu0 0.0
    %810 = vmatpush1.msra.mxu0 %v254
    %811 = vmatprep.subr.mxu0 0.0
    %812 = vmatpush1.msra.mxu0 %v255
    %813 = vmatprep.subr.mxu0 0.0
    %814 = vmatpush1.msra.mxu0 %v256
    %815 = vmatprep.subr.mxu0 0.0
    %816 = vmatpush1.msra.mxu0 %v257
    %817 = vmatprep.subr.mxu0 0.0
    %818 = vmatpush1.msra.mxu0 %v258
    %819 = vmatprep.subr.mxu0 0.0
    %820 = vmatpush1.msra.mxu0 %v259
    %821 = vmatprep.mubr.f32.mxu0 %v374
    %822 = vmatmul.mubr.f32.gmra.mrb[0].mxu0 %v370
    %v823 = vpop.f32.mrb[0].mxu0
    %v824 = vadd.f32 %v754, %v823
    %v825 = vpop.f32.mrb[0].mxu0
    %826 = vdwg.mxu0
    %827 = vmatprep.subr.mxu0 0.0
    %828 = vmatpush1.msra.mxu0 %v260
    %829 = vmatprep.subr.mxu0 0.0
    %830 = vmatpush1.msra.mxu0 %v261
    %831 = vmatprep.subr.mxu0 0.0
    %832 = vmatpush1.msra.mxu0 %v262
    %833 = vmatprep.subr.mxu0 0.0
    %834 = vmatpush1.msra.mxu0 %v263
    %835 = vmatprep.subr.mxu0 0.0
    %836 = vmatpush1.msra.mxu0 %v264
    %837 = vmatprep.subr.mxu0 0.0
    %838 = vmatpush1.msra.mxu0 %v265
    %839 = vmatprep.subr.mxu0 0.0
    %840 = vmatpush1.msra.mxu0 %v266
    %841 = vmatprep.subr.mxu0 0.0
    %842 = vmatpush1.msra.mxu0 %v267
    %843 = vmatprep.subr.mxu0 0.0
    %844 = vmatpush1.msra.mxu0 %v268
    %845 = vmatprep.subr.mxu0 0.0
    %846 = vmatpush1.msra.mxu0 %v269
    %847 = vmatprep.subr.mxu0 0.0
    %848 = vmatpush1.msra.mxu0 %v270
    %849 = vmatprep.subr.mxu0 0.0
    %850 = vmatpush1.msra.mxu0 %v271
    %851 = vmatprep.subr.mxu0 0.0
    %852 = vmatpush1.msra.mxu0 %v272
    %853 = vmatprep.subr.mxu0 0.0
    %854 = vmatpush1.msra.mxu0 %v273
    %855 = vmatprep.subr.mxu0 0.0
    %856 = vmatpush1.msra.mxu0 %v274
    %857 = vmatprep.subr.mxu0 0.0
    %858 = vmatpush1.msra.mxu0 %v275
    %859 = vmatprep.subr.mxu0 0.0
    %860 = vmatpush1.msra.mxu0 %v276
    %861 = vmatprep.subr.mxu0 0.0
    %862 = vmatpush1.msra.mxu0 %v277
    %863 = vmatprep.subr.mxu0 0.0
    %864 = vmatpush1.msra.mxu0 %v278
    %865 = vmatprep.subr.mxu0 0.0
    %866 = vmatpush1.msra.mxu0 %v279
    %867 = vmatprep.subr.mxu0 0.0
    %868 = vmatpush1.msra.mxu0 %v280
    %869 = vmatprep.subr.mxu0 0.0
    %870 = vmatpush1.msra.mxu0 %v281
    %871 = vmatprep.subr.mxu0 0.0
    %872 = vmatpush1.msra.mxu0 %v282
    %873 = vmatprep.subr.mxu0 0.0
    %874 = vmatpush1.msra.mxu0 %v283
    %875 = vmatprep.subr.mxu0 0.0
    %876 = vmatpush1.msra.mxu0 %v284
    %877 = vmatprep.subr.mxu0 0.0
    %878 = vmatpush1.msra.mxu0 %v285
    %879 = vmatprep.subr.mxu0 0.0
    %880 = vmatpush1.msra.mxu0 %v286
    %881 = vmatprep.subr.mxu0 0.0
    %882 = vmatpush1.msra.mxu0 %v287
    %883 = vmatprep.subr.mxu0 0.0
    %884 = vmatpush1.msra.mxu0 %v288
    %885 = vmatprep.subr.mxu0 0.0
    %886 = vmatpush1.msra.mxu0 %v289
    %887 = vmatprep.subr.mxu0 0.0
    %888 = vmatpush1.msra.mxu0 %v290
    %889 = vmatprep.subr.mxu0 0.0
    %890 = vmatpush1.msra.mxu0 %v291
    %891 = vmatprep.mubr.f32.mxu0 %v382
    %892 = vmatmul.mubr.f32.gmra.mrb[0].mxu0 %v378
    %v893 = vpop.f32.mrb[0].mxu0
    %v894 = vadd.f32 %v824, %v893
    %v895 = vpop.f32.mrb[0].mxu0
    %896 = vdwg.mxu0
    %897 = vmatprep.subr.mxu0 0.0
    %898 = vmatpush1.msra.mxu0 %v292
    %899 = vmatprep.subr.mxu0 0.0
    %900 = vmatpush1.msra.mxu0 %v293
    %901 = vmatprep.subr.mxu0 0.0
    %902 = vmatpush1.msra.mxu0 %v294
    %903 = vmatprep.subr.mxu0 0.0
    %904 = vmatpush1.msra.mxu0 %v295
    %905 = vmatprep.subr.mxu0 0.0
    %906 = vmatpush1.msra.mxu0 %v296
    %907 = vmatprep.subr.mxu0 0.0
    %908 = vmatpush1.msra.mxu0 %v297
    %909 = vmatprep.subr.mxu0 0.0
    %910 = vmatpush1.msra.mxu0 %v298
    %911 = vmatprep.subr.mxu0 0.0
    %912 = vmatpush1.msra.mxu0 %v299
    %913 = vmatprep.subr.mxu0 0.0
    %914 = vmatpush1.msra.mxu0 %v300
    %915 = vmatprep.subr.mxu0 0.0
    %916 = vmatpush1.msra.mxu0 %v301
    %917 = vmatprep.subr.mxu0 0.0
    %918 = vmatpush1.msra.mxu0 %v302
    %919 = vmatprep.subr.mxu0 0.0
    %920 = vmatpush1.msra.mxu0 %v303
    %921 = vmatprep.subr.mxu0 0.0
    %922 = vmatpush1.msra.mxu0 %v304
    %923 = vmatprep.subr.mxu0 0.0
    %924 = vmatpush1.msra.mxu0 %v305
    %925 = vmatprep.subr.mxu0 0.0
    %926 = vmatpush1.msra.mxu0 %v306
    %927 = vmatprep.subr.mxu0 0.0
    %928 = vmatpush1.msra.mxu0 %v307
    %929 = vmatprep.subr.mxu0 0.0
    %930 = vmatpush1.msra.mxu0 %v308
    %931 = vmatprep.subr.mxu0 0.0
    %932 = vmatpush1.msra.mxu0 %v309
    %933 = vmatprep.subr.mxu0 0.0
    %934 = vmatpush1.msra.mxu0 %v310
    %935 = vmatprep.subr.mxu0 0.0
    %936 = vmatpush1.msra.mxu0 %v311
    %937 = vmatprep.subr.mxu0 0.0
    %938 = vmatpush1.msra.mxu0 %v312
    %939 = vmatprep.subr.mxu0 0.0
    %940 = vmatpush1.msra.mxu0 %v313
    %941 = vmatprep.subr.mxu0 0.0
    %942 = vmatpush1.msra.mxu0 %v314
    %943 = vmatprep.subr.mxu0 0.0
    %944 = vmatpush1.msra.mxu0 %v315
    %945 = vmatprep.subr.mxu0 0.0
    %946 = vmatpush1.msra.mxu0 %v316
    %947 = vmatprep.subr.mxu0 0.0
    %948 = vmatpush1.msra.mxu0 %v317
    %949 = vmatprep.subr.mxu0 0.0
    %950 = vmatpush1.msra.mxu0 %v318
    %951 = vmatprep.subr.mxu0 0.0
    %952 = vmatpush1.msra.mxu0 %v319
    %953 = vmatprep.subr.mxu0 0.0
    %954 = vmatpush1.msra.mxu0 %v320
    %955 = vmatprep.subr.mxu0 0.0
    %956 = vmatpush1.msra.mxu0 %v321
    %957 = vmatprep.subr.mxu0 0.0
    %958 = vmatpush1.msra.mxu0 %v322
    %959 = vmatprep.subr.mxu0 0.0
    %960 = vmatpush1.msra.mxu0 %v323
    %961 = vmatprep.mubr.f32.mxu0 %v390
    %962 = vmatmul.mubr.f32.gmra.mrb[0].mxu0 %v386
    %v963 = vpop.f32.mrb[0].mxu0
    %v964 = vadd.f32 %v894, %v963
    %v965 = vpop.f32.mrb[0].mxu0
    %966 = vdwg.mxu0
    %v967 = vtanh.pop %v964
    %v968 = vld [vmem:[%s3] sm:$0x1]
    %v969 = vld [vmem:[%s4] sm:$0x1]
    %v970 = vmul.f32 %v967, %v969
    %v971 = vadd.f32 %v968, %v970
    %972 = vst [vmem:[#allocation8] sm:$0x1] %v971
    %v973 = vmax.f32 %v971, 1e-20
    %v974 = vlog2.pop %v973
    %v975 = vmul.f32 %v974, 0.6931472
    %v976 = vld [vmem:[#allocation7] sm:$0xff]
    %v977 = vld [vmem:[#allocation7 + $0x8] sm:$0xff]
    %v978 = vld [vmem:[#allocation7 + $0x10] sm:$0xff]
    %v979 = vld [vmem:[#allocation7 + $0x18] sm:$0xff]
    %v980 = vld [vmem:[#allocation7 + $0x20] sm:$0xff]
    %v981 = vld [vmem:[#allocation7 + $0x28] sm:$0xff]
    %v982 = vld [vmem:[#allocation7 + $0x30] sm:$0xff]
    %v983 = vld [vmem:[#allocation7 + $0x38] sm:$0xff]
    %v984 = vld [vmem:[#allocation7 + $0x40] sm:$0xff]
    %v985 = vld [vmem:[#allocation7 + $0x48] sm:$0xff]
    %v986 = vld [vmem:[#allocation7 + $0x50] sm:$0xff]
    %v987 = vld [vmem:[#allocation7 + $0x58] sm:$0xff]
    %v988 = vld [vmem:[#allocation7 + $0x60] sm:$0xff]
    %v989 = vld [vmem:[#allocation7 + $0x68] sm:$0xff]
    %v990 = vld [vmem:[#allocation7 + $0x70] sm:$0xff]
    %v991 = vld [vmem:[#allocation7 + $0x78] sm:$0xff]
    %992 = vmatprep.subr.mxu0 0.0
    %993 = vmatpush1.msra.mxu0 %v976
    %994 = vmatprep.subr.mxu0 0.0
    %995 = vmatpush1.msra.mxu0 %v977
    %996 = vmatprep.subr.mxu0 0.0
    %997 = vmatpush1.msra.mxu0 %v978
    %998 = vmatprep.subr.mxu0 0.0
    %999 = vmatpush1.msra.mxu0 %v979
    %1000 = vmatprep.subr.mxu0 0.0
    %1001 = vmatpush1.msra.mxu0 %v980
    %1002 = vmatprep.subr.mxu0 0.0
    %1003 = vmatpush1.msra.mxu0 %v981
    %1004 = vmatprep.subr.mxu0 0.0
    %1005 = vmatpush1.msra.mxu0 %v982
    %1006 = vmatprep.subr.mxu0 0.0
    %1007 = vmatpush1.msra.mxu0 %v983
    %1008 = vmatprep.subr.mxu0 0.0
    %1009 = vmatpush1.msra.mxu0 %v984
    %1010 = vmatprep.subr.mxu0 0.0
    %1011 = vmatpush1.msra.mxu0 %v985
    %1012 = vmatprep.subr.mxu0 0.0
    %1013 = vmatpush1.msra.mxu0 %v986
    %1014 = vmatprep.subr.mxu0 0.0
    %1015 = vmatpush1.msra.mxu0 %v987
    %1016 = vmatprep.subr.mxu0 0.0
    %1017 = vmatpush1.msra.mxu0 %v988
    %1018 = vmatprep.subr.mxu0 0.0
    %1019 = vmatpush1.msra.mxu0 %v989
    %1020 = vmatprep.subr.mxu0 0.0
    %1021 = vmatpush1.msra.mxu0 %v990
    %1022 = vmatprep.subr.mxu0 0.0
    %1023 = vmatpush1.msra.mxu0 %v991
    %1024 = vmatprep.subr.mxu0 0.0
    %1025 = vmatpush1.msra.mxu0 0.0
    %1026 = vmatprep.subr.mxu0 0.0
    %1027 = vmatpush1.msra.mxu0 0.0
    %1028 = vmatprep.subr.mxu0 0.0
    %1029 = vmatpush1.msra.mxu0 0.0
    %1030 = vmatprep.subr.mxu0 0.0
    %1031 = vmatpush1.msra.mxu0 0.0
    %1032 = vmatprep.subr.mxu0 0.0
    %1033 = vmatpush1.msra.mxu0 0.0
    %1034 = vmatprep.subr.mxu0 0.0
    %1035 = vmatpush1.msra.mxu0 0.0
    %1036 = vmatprep.subr.mxu0 0.0
    %1037 = vmatpush1.msra.mxu0 0.0
    %1038 = vmatprep.subr.mxu0 0.0
    %1039 = vmatpush1.msra.mxu0 0.0
    %1040 = vmatprep.subr.mxu0 0.0
    %1041 = vmatpush1.msra.mxu0 0.0
    %1042 = vmatprep.subr.mxu0 0.0
    %1043 = vmatpush1.msra.mxu0 0.0
    %1044 = vmatprep.subr.mxu0 0.0
    %1045 = vmatpush1.msra.mxu0 0.0
    %1046 = vmatprep.subr.mxu0 0.0
    %1047 = vmatpush1.msra.mxu0 0.0
    %1048 = vmatprep.subr.mxu0 0.0
    %1049 = vmatpush1.msra.mxu0 0.0
    %1050 = vmatprep.subr.mxu0 0.0
    %1051 = vmatpush1.msra.mxu0 0.0
    %1052 = vmatprep.subr.mxu0 0.0
    %1053 = vmatpush1.msra.mxu0 0.0
    %1054 = vmatprep.subr.mxu0 0.0
    %1055 = vmatpush1.msra.mxu0 0.0
    %1056 = vmatprep.mubr.f32.mxu0 0.0
    %1057 = vmatmul.mubr.f32.gmra.mrb[0].mxu0 %v975
    %v1058 = vpop.f32.mrb[0].mxu0
    %v1059 = vadd.f32 0.0, %v1058
    %v1060 = vpop.f32.mrb[0].mxu0
    %1061 = vdwg.mxu0
    %v1062 = vmul.f32 %v1059, 1.442695
    %v1063 = vpow.pop %v1062
    %1064 = vst [vmem:[#allocation9] sm:$0x1] %v1063
    // Predicated region
    $region38: #{tpu_custom_call.1} parent=1 // pred_check
      _
    $region39: #{tpu_custom_call.1} parent=1 // pred_check_branch
      %1066 = sbr.rel (0) target = $region41
    $region40: #{tpu_custom_call.1} parent=1 // pred_region
      %s1068 = ssub.s32 16, 16
      %1069 = vsyncadd [#allocation4], %s1068
      %s1071 = sshll.u32 [#allocation8], 4
      %s1072 = int_to_ptr.vmem [resolvable:$true] %s1071
      %1074 = dma.vmem_to_hbm [thread:$0]  %s1072, 16, %s6, [#allocation4]
    $region41: #{tpu_custom_call.1} parent=1 // pred_fallthru
      _
    // Predicated region
    $region42: #{tpu_custom_call.1} parent=1 // pred_check
      _
    $region43: #{tpu_custom_call.1} parent=1 // pred_check_branch
      %1076 = sbr.rel (0) target = $region45
    $region44: #{tpu_custom_call.1} parent=1 // pred_region
      %s1078 = ssub.s32 16, 16
      %1079 = vsyncadd [#allocation10], %s1078
      %s1081 = sshll.u32 [#allocation9], 4
      %s1082 = int_to_ptr.vmem [resolvable:$true] %s1081
      %1084 = dma.vmem_to_hbm [thread:$0]  %s1082, 16, %s7, [#allocation10]
    $region45: #{tpu_custom_call.1} parent=1 // pred_fallthru
      _
    // Predicated region
    $region46: #{tpu_custom_call.1} parent=1 // pred_check
      _
    $region47: #{tpu_custom_call.1} parent=1 // pred_check_branch
      %1086 = sbr.rel (0) target = $region49
    $region48: #{tpu_custom_call.1} parent=1 // pred_region
      %1087 = dma.done [#allocation4], 16
    $region49: #{tpu_custom_call.1} parent=1 // pred_fallthru
      _
    // Predicated region
    $region50: #{tpu_custom_call.1} parent=1 // pred_check
      _
    $region51: #{tpu_custom_call.1} parent=1 // pred_check_branch
      %1089 = sbr.rel (0) target = $region53
    $region52: #{tpu_custom_call.1} parent=1 // pred_region
      %1090 = dma.done [#allocation10], 16
    $region53: #{tpu_custom_call.1} parent=1 // pred_fallthru
      _
    %1091 = vsyncpa [#allocation3], 1
    %1092 = vsyncpa [#allocation6], 1
    %1093 = vsyncpa [#allocation4], 1
    %1094 = vsyncpa [#allocation10], 1

</llo_original>
